<compile_context>
chip_gen: v7x
topology: tpu7x:2x2x1
jax: 0.10.0
libtpu: 0.0.40
codegen_flags: <defaults>
</compile_context>

<pallas_src>
import functools

import jax
import jax.numpy as jnp
from jax.experimental import pallas as pl
from jax.experimental.pallas import tpu as pltpu


def _embed_kernel(patches_ref, w_ref, posb_ref, cls_ref, out_ref):
    """One (batch b, sequence-tile n) grid step.

    patches_ref: (1, tn, K) bf16  patch rows [n*tn, (n+1)*tn) of batch b
    w_ref:       (K, E)     bf16  projection weights (constant index_map ->
                                  DMA'd once, never re-fetched per step)
    posb_ref:    (tn, E)    f32   pos_embedding + conv bias for these rows
    cls_ref:     (1, E)     f32   cls token (constant index_map)
    out_ref:     (1, S, E)        S = N + 1; block index depends only on b, so
                                  the block stays resident in VMEM across the
                                  n axis, each step fills its own row range,
                                  and it is written back once per batch.
    """
    n = pl.program_id(1)
    tn = posb_ref.shape[0]

    # cls token -> sequence position 0 (written once per batch element).
    @pl.when(n == 0)
    def _():
        out_ref[0, pl.ds(0, 1), :] = cls_ref[...].astype(out_ref.dtype)

    # bf16 x bf16 matmul with f32 accumulation on the MXU, adds kept in f32.
    y = jnp.dot(patches_ref[0], w_ref[...], preferred_element_type=jnp.float32)
    y = y + posb_ref[...]

    # Direct (dynamic-offset) store of this tile; no in-kernel concatenate,
    # no full-(N+1, E) shifted temporary.
    out_ref[0, pl.ds(1 + n * tn, tn), :] = y.astype(out_ref.dtype)


def _pick_seq_tile(n_patches: int) -> int:
    """Largest power-of-two tile (<= 512) that divides N; else the whole N."""
    for cand in (512, 256, 128, 64, 32, 16, 8):
        if cand < n_patches and n_patches % cand == 0:
            return cand
    return n_patches


@functools.partial(jax.jit, static_argnums=(5,))
def embed_layer_forward(x, conv_w, conv_b, pos_embedding, cls_token, patch_size):
    """Forward pass of EmbedLayer.

    x:             (B, C, H, W)  float32, NCHW like PyTorch
    conv_w:        (E, C, P, P)  Conv2d weight (kernel=stride=P)
    conv_b:        (E,)          Conv2d bias
    pos_embedding: (1, N, E)
    cls_token:     (1, 1, E)
    returns:       (B, N+1, E)
    """
    B, C, H, W = x.shape
    E = conv_w.shape[0]
    P = patch_size
    Hp, Wp = H // P, W // P
    N = Hp * Wp
    K = C * P * P
    S = N + 1
    tn = _pick_seq_tile(N)

    # --- im2col (wrapper glue) ---------------------------------------------
    # The reshape is free; under jit the transpose + bf16 cast fuse into a
    # single HBM pass, and the kernel then reads half-width patch bytes.
    # Patch features are flattened in (c, ph, pw) order to match Conv2d.
    xp = x.reshape(B, C, Hp, P, Wp, P).transpose(0, 2, 4, 1, 3, 5)
    patches = xp.reshape(B, N, K).astype(jnp.bfloat16)

    w_mat = conv_w.reshape(E, K).T.astype(jnp.bfloat16)            # (K, E)
    # Fold the conv bias into the positional embedding once (parameter-sized,
    # amortized over all batches) -> one fewer input stream for the kernel.
    pos_bias = (pos_embedding.reshape(N, E)
                + conv_b[None, :]).astype(jnp.float32)             # (N, E)
    cls = cls_token.reshape(1, E).astype(jnp.float32)              # (1, E)

    out = pl.pallas_call(
        _embed_kernel,
        out_shape=jax.ShapeDtypeStruct((B, S, E), x.dtype),
        grid_spec=pltpu.PrefetchScalarGridSpec(
            num_scalar_prefetch=0,
            grid=(B, N // tn),
            in_specs=[
                pl.BlockSpec((1, tn, K), lambda b, n: (b, n, 0)),
                pl.BlockSpec((K, E), lambda b, n: (0, 0)),    # constant -> 1 DMA
                pl.BlockSpec((tn, E), lambda b, n: (n, 0)),
                pl.BlockSpec((1, E), lambda b, n: (0, 0)),    # constant -> 1 DMA
            ],
            out_specs=pl.BlockSpec((1, S, E), lambda b, n: (b, 0, 0)),
        ),
        compiler_params=pltpu.CompilerParams(
            # batch axis is parallel (megacore); the sequence-tile axis revisits
            # the resident output block, so it must be "arbitrary".
            dimension_semantics=("parallel", "arbitrary")),
    )(patches, w_mat, pos_bias, cls)

    # TODO(synk): nn.Dropout with p=0.0 (and eval mode) is identity; no-op here.
    return out


def _reference(x, conv_w, conv_b, pos_embedding, cls_token, patch_size):
    """Pure-JAX f32 reference mirroring the PyTorch forward."""
    B, C, H, W = x.shape
    E = conv_w.shape[0]
    P = patch_size
    Hp, Wp = H // P, W // P
    N = Hp * Wp
    xp = (x.reshape(B, C, Hp, P, Wp, P)
          .transpose(0, 2, 4, 1, 3, 5)
          .reshape(B, N, C * P * P))
    y = jnp.einsum("bnk,ek->bne", xp, conv_w.reshape(E, -1)) + conv_b[None, None, :]
    y = y + pos_embedding
    cls = jnp.broadcast_to(cls_token, (B, 1, E))
    return jnp.concatenate([cls, y], axis=1)


if __name__ == "__main__":
    # Small but lane-dense config: B=2, C=4, image=32, patch=8 -> N=16 patches,
    # K = C*P*P = 256 (multiple of 128), E = 128 (full lane width), seq tile 8.
    B, C, IMG, P, E = 2, 4, 32, 8, 128
    key = jax.random.PRNGKey(0)
    k_x, k_w, k_b, k_pos, k_cls = jax.random.split(key, 5)

    x = jax.random.normal(k_x, (B, C, IMG, IMG), dtype=jnp.float32)
    conv_w = jax.random.normal(k_w, (E, C, P, P), dtype=jnp.float32) * 0.05
    conv_b = jax.random.normal(k_b, (E,), dtype=jnp.float32) * 0.05
    # (PyTorch inits these to zeros; use small random values so the adds are exercised.)
    pos_embedding = jax.random.normal(k_pos, (1, (IMG // P) ** 2, E), dtype=jnp.float32) * 0.02
    cls_token = jax.random.normal(k_cls, (1, 1, E), dtype=jnp.float32) * 0.02

    out = embed_layer_forward(x, conv_w, conv_b, pos_embedding, cls_token, P)
    out = jax.block_until_ready(out)

    ref = _reference(x, conv_w, conv_b, pos_embedding, cls_token, P)
    N = (IMG // P) ** 2
    assert out.shape == (B, N + 1, E), out.shape
    # bf16 matmul operands with f32 accumulation -> loosened tolerance vs the
    # f32 reference (per review guidance).
    assert jnp.allclose(out, ref, atol=3e-2, rtol=2e-2), "mismatch vs reference"

    print("KERNEL_OK")
</pallas_src>

<mosaic_0001>
module attributes {stable_mosaic.version = 11 : i64} {
  func.func @_embed_kernel(%arg0: i32, %arg1: i32, %arg2: memref<1x8x256xbf16, #tpu.memory_space<vmem>>, %arg3: memref<256x128xbf16, #tpu.memory_space<vmem>>, %arg4: memref<8x128xf32, #tpu.memory_space<vmem>>, %arg5: memref<1x128xf32, #tpu.memory_space<vmem>>, %arg6: memref<1x17x128xf32, #tpu.memory_space<vmem>>) attributes {dimension_semantics = [#tpu.dimension_semantics<parallel>, #tpu.dimension_semantics<arbitrary>], iteration_bounds = array<i64: 2, 2>, scalar_prefetch = 0 : i64, scratch_operands = 0 : i64, tpu.core_type = #tpu.core_type<tc>, window_params = [{transform_indices = @transform_0, window_bounds = array<i64: 1, 8, 256>}, {pipeline_mode = #tpu.pipeline_mode<synchronous>, transform_indices = @transform_1, window_bounds = array<i64: 256, 128>}, {transform_indices = @transform_2, window_bounds = array<i64: 8, 128>}, {pipeline_mode = #tpu.pipeline_mode<synchronous>, transform_indices = @transform_3, window_bounds = array<i64: 1, 128>}, {transform_indices = @transform_4, window_bounds = array<i64: 1, 17, 128>}]} {
    %c0_i32 = arith.constant 0 : i32
    %0 = arith.cmpi eq, %arg1, %c0_i32 : i32
    %1 = arith.extui %0 : i1 to i32
    %c0_i32_0 = arith.constant 0 : i32
    %2 = arith.cmpi ne, %1, %c0_i32_0 : i32
    scf.if %2 {
      %c0_9 = arith.constant 0 : index
      %c0_10 = arith.constant 0 : index
      %15 = vector.load %arg5[%c0_9, %c0_10] : memref<1x128xf32, #tpu.memory_space<vmem>>, vector<1x128xf32>
      %c0_11 = arith.constant 0 : index
      %c0_12 = arith.constant 0 : index
      %c0_13 = arith.constant 0 : index
      %16 = vector.load %arg6[%c0_11, %c0_12, %c0_13] : memref<1x17x128xf32, #tpu.memory_space<vmem>>, vector<1x1x128xf32>
      %17 = vector.shape_cast %16 : vector<1x1x128xf32> to vector<1x128xf32>
      %18 = vector.shape_cast %15 : vector<1x128xf32> to vector<1x1x128xf32>
      tpu.vector_store %arg6[%c0_11, %c0_12, %c0_13], %18 {strides = array<i32>} : memref<1x17x128xf32, #tpu.memory_space<vmem>>, vector<1x1x128xf32>,
    } else {
    }
    %c0 = arith.constant 0 : index
    %c0_1 = arith.constant 0 : index
    %c0_2 = arith.constant 0 : index
    %3 = vector.load %arg2[%c0, %c0_1, %c0_2] : memref<1x8x256xbf16, #tpu.memory_space<vmem>>, vector<1x8x256xbf16>
    %4 = vector.shape_cast %3 : vector<1x8x256xbf16> to vector<8x256xbf16>
    %c0_3 = arith.constant 0 : index
    %c0_4 = arith.constant 0 : index
    %5 = vector.load %arg3[%c0_3, %c0_4] : memref<256x128xbf16, #tpu.memory_space<vmem>>, vector<256x128xbf16>
    %cst = arith.constant dense<0.000000e+00> : vector<8x128xf32>
    %6 = tpu.matmul %4, %5, %cst {dimension_numbers = #tpu.dot_dimension_numbers<[1], [0], [0], [1], [0, 0, 1, 1], [], []>} : vector<8x256xbf16>, vector<256x128xbf16>, vector<8x128xf32> -> vector<8x128xf32>
    %c0_5 = arith.constant 0 : index
    %c0_6 = arith.constant 0 : index
    %7 = vector.load %arg4[%c0_5, %c0_6] : memref<8x128xf32, #tpu.memory_space<vmem>>, vector<8x128xf32>
    %8 = arith.addf %6, %7 : vector<8x128xf32>
    %c8_i32 = arith.constant 8 : i32
    %9 = arith.muli %arg1, %c8_i32 : i32
    %c1_i32 = arith.constant 1 : i32
    %10 = arith.addi %c1_i32, %9 : i32
    %c0_7 = arith.constant 0 : index
    %11 = arith.index_cast %10 : i32 to index
    %c0_8 = arith.constant 0 : index
    %12 = vector.load %arg6[%c0_7, %11, %c0_8] : memref<1x17x128xf32, #tpu.memory_space<vmem>>, vector<1x8x128xf32>
    %13 = vector.shape_cast %12 : vector<1x8x128xf32> to vector<8x128xf32>
    %14 = vector.shape_cast %8 : vector<8x128xf32> to vector<1x8x128xf32>
    tpu.vector_store %arg6[%c0_7, %11, %c0_8], %14 {strides = array<i32>} : memref<1x17x128xf32, #tpu.memory_space<vmem>>, vector<1x8x128xf32>,
    return
  }
  func.func @transform_0(%arg0: i32, %arg1: i32) -> (i32, i32, i32) {
    %c0_i32 = arith.constant 0 : i32
    %c0_i32_0 = arith.constant 0 : i32
    return %arg0, %arg1, %c0_i32 : i32, i32, i32
  }
  func.func @transform_1(%arg0: i32, %arg1: i32) -> (i32, i32) {
    %c0_i32 = arith.constant 0 : i32
    %c0_i32_0 = arith.constant 0 : i32
    %c0_i32_1 = arith.constant 0 : i32
    return %c0_i32, %c0_i32_0 : i32, i32
  }
  func.func @transform_2(%arg0: i32, %arg1: i32) -> (i32, i32) {
    %c0_i32 = arith.constant 0 : i32
    %c0_i32_0 = arith.constant 0 : i32
    return %arg1, %c0_i32 : i32, i32
  }
  func.func @transform_3(%arg0: i32, %arg1: i32) -> (i32, i32) {
    %c0_i32 = arith.constant 0 : i32
    %c0_i32_0 = arith.constant 0 : i32
    %c0_i32_1 = arith.constant 0 : i32
    return %c0_i32, %c0_i32_0 : i32, i32
  }
  func.func @transform_4(%arg0: i32, %arg1: i32) -> (i32, i32, i32) {
    %c0_i32 = arith.constant 0 : i32
    %c0_i32_0 = arith.constant 0 : i32
    %c0_i32_1 = arith.constant 0 : i32
    return %arg0, %c0_i32, %c0_i32_0 : i32, i32, i32
  }
}

</mosaic_0001>

<llo_original>
// kernel: embed_layer_forward.1
$region0: #{embed_layer_forward.1}
  #allocation0 [shape = 'u32[]', space=smem, size = 0x4, offset = 0x4, fixed_abs, tag = 'smem constant byte address 0x4 - core index']
  #allocation1 [shape = 'u32[144,128]{1,0:T(1,128)}', space=vmem, size = 0x12000, scoped, tag = 'internal scratch']
  %s0 = inlined_call_operand.vmem [shape: bf16[2,16,256], index: 0, kind: input, shape index: {}]
  %s1 = inlined_call_operand.vmem [shape: bf16[256,128], index: 1, kind: input, shape index: {}]
  %s2 = inlined_call_operand.vmem [shape: f32[16,128], index: 2, kind: input, shape index: {}]
  %s3 = inlined_call_operand.vmem [shape: f32[1,128], index: 3, kind: input, shape index: {}]
  %s4 = inlined_call_operand.vmem [shape: f32[2,17,128], index: 4, kind: output, shape index: {}]
  %s5 = sld [smem:[#allocation0]]
  $region53: #{embed_layer_forward.1} parent=0
    _
  %s7 = ssub.s32 1, %s5
  %s8 = scalar_select 0, %s7, %s5
  loop: start=0, step=1, limit=6
  $region2: #{embed_layer_forward.1} parent=0 // loop_pre_header
    _
  $region3: #{embed_layer_forward.1} parent=0 // loop_header
    %s10 = sphi 0, %s14
    %p11 = scmp.ge.s32.totalorder %s10, 6
    %s17 = sphi 0, %s29
    %s18 = sphi 0, %s25
    %s19 = sphi 0, %s17
    %s20 = sphi 0, %s18
    %s21 = sphi 0, %s19
    %s22 = sphi 0, %s20
    %s34 = sphi 0, %s36
    %s37 = sphi 0, %s34
    %s38 = sphi 0, %s37
    %s54 = sphi 0, %s38
    %s58 = sphi 0, %s58
    %s60 = sphi 0, %s58
    %s61 = sphi 0, %s60
    %s75 = sphi 0, %s61
    %s81 = sphi 0, %s83
    %s84 = sphi 0, %s81
    %s85 = sphi 0, %s84
    %s101 = sphi 0, %s85
    %s105 = sphi 0, %s105
    %s107 = sphi 0, %s105
    %s108 = sphi 0, %s107
    %s122 = sphi 0, %s108
    %s128 = sphi 0, %s130
    %s131 = sphi 0, %s128
    %s132 = sphi 0, %s131
    %s148 = sphi 0, %s132
  $region4: #{embed_layer_forward.1} parent=0 // loop_header_branch
    %13 = sbr.rel (%p11) target = $region8
  $region5: #{embed_layer_forward.1} parent=0 // loop_body
    %s15 = ssub.s32 %s10, 1
    %s16 = ssub.s32 %s10, 2
    %s23 = sadd.s32 1, %s18
    %p24 = scmp.ge.s32.totalorder %s23, 2
    %s25 = scalar_select %p24, 0, %s23
    %s26 = sadd.s32 1, %s17
    %s27 = scalar_select %p24, %s26, %s17
    %p28 = scmp.ge.s32.totalorder %s27, 2
    %s29 = scalar_select %p28, 0, %s27
    %s30 = ssub.s32 %s17, %s29
    %s31 = ssub.s32 %s18, %s25
    %s32 = sor.u32 %s30, %s31
    %p33 = scmp.eq.s32.totalorder %s32, 0
    %s35 = sadd.s32 %s34, 1
    %s36 = scalar_select %p33, %s34, %s35
    %p39 = pneg %p33
    %p40 = scmp.eq.s32.totalorder %s10, 3
    %p41 = por %p39, %p40
    %p42 = scmp.ne.s32.totalorder %s34, %s37
    %p43 = scmp.eq.s32.totalorder %s10, 0
    %p44 = por %p42, %p43
    %p45 = scmp.ne.s32.totalorder %s34, %s37
    %p46 = scmp.eq.s32.totalorder %s15, 3
    %p47 = por %p45, %p46
    %p48 = scmp.ne.s32.totalorder %s37, %s38
    %p49 = scmp.eq.s32.totalorder %s15, 0
    %p50 = por %p48, %p49
    %p51 = scmp.ne.s32.totalorder %s37, %s38
    %p52 = scmp.eq.s32.totalorder %s16, 3
    %p53 = por %p51, %p52
    %p55 = scmp.ne.s32.totalorder %s38, %s54
    %p56 = scmp.eq.s32.totalorder %s16, 0
    %p57 = por %p55, %p56
    %s59 = sadd.s32 %s58, 1
    %p62 = scmp.eq.s32.totalorder %s10, 3
    %p63 = scmp.ne.s32.totalorder %s58, %s60
    %p64 = scmp.eq.s32.totalorder %s10, 0
    %p65 = por %p63, %p64
    %p66 = scmp.ne.s32.totalorder %s58, %s60
    %p67 = scmp.eq.s32.totalorder %s15, 3
    %p68 = por %p66, %p67
    %p69 = scmp.ne.s32.totalorder %s60, %s61
    %p70 = scmp.eq.s32.totalorder %s15, 0
    %p71 = por %p69, %p70
    %p72 = scmp.ne.s32.totalorder %s60, %s61
    %p73 = scmp.eq.s32.totalorder %s16, 3
    %p74 = por %p72, %p73
    %p76 = scmp.ne.s32.totalorder %s61, %s75
    %p77 = scmp.eq.s32.totalorder %s16, 0
    %p78 = por %p76, %p77
    %s79 = ssub.s32 %s18, %s25
    %p80 = scmp.eq.s32.totalorder %s79, 0
    %s82 = sadd.s32 %s81, 1
    %s83 = scalar_select %p80, %s81, %s82
    %p86 = pneg %p80
    %p87 = scmp.eq.s32.totalorder %s10, 3
    %p88 = por %p86, %p87
    %p89 = scmp.ne.s32.totalorder %s81, %s84
    %p90 = scmp.eq.s32.totalorder %s10, 0
    %p91 = por %p89, %p90
    %p92 = scmp.ne.s32.totalorder %s81, %s84
    %p93 = scmp.eq.s32.totalorder %s15, 3
    %p94 = por %p92, %p93
    %p95 = scmp.ne.s32.totalorder %s84, %s85
    %p96 = scmp.eq.s32.totalorder %s15, 0
    %p97 = por %p95, %p96
    %p98 = scmp.ne.s32.totalorder %s84, %s85
    %p99 = scmp.eq.s32.totalorder %s16, 3
    %p100 = por %p98, %p99
    %p102 = scmp.ne.s32.totalorder %s85, %s101
    %p103 = scmp.eq.s32.totalorder %s16, 0
    %p104 = por %p102, %p103
    %s106 = sadd.s32 %s105, 1
    %p109 = scmp.eq.s32.totalorder %s10, 3
    %p110 = scmp.ne.s32.totalorder %s105, %s107
    %p111 = scmp.eq.s32.totalorder %s10, 0
    %p112 = por %p110, %p111
    %p113 = scmp.ne.s32.totalorder %s105, %s107
    %p114 = scmp.eq.s32.totalorder %s15, 3
    %p115 = por %p113, %p114
    %p116 = scmp.ne.s32.totalorder %s107, %s108
    %p117 = scmp.eq.s32.totalorder %s15, 0
    %p118 = por %p116, %p117
    %p119 = scmp.ne.s32.totalorder %s107, %s108
    %p120 = scmp.eq.s32.totalorder %s16, 3
    %p121 = por %p119, %p120
    %p123 = scmp.ne.s32.totalorder %s108, %s122
    %p124 = scmp.eq.s32.totalorder %s16, 0
    %p125 = por %p123, %p124
    %s126 = ssub.s32 %s17, %s29
    %p127 = scmp.eq.s32.totalorder %s126, 0
    %s129 = sadd.s32 %s128, 1
    %s130 = scalar_select %p127, %s128, %s129
    %p133 = pneg %p127
    %p134 = scmp.eq.s32.totalorder %s10, 3
    %p135 = por %p133, %p134
    %p136 = scmp.ne.s32.totalorder %s128, %s131
    %p137 = scmp.eq.s32.totalorder %s10, 0
    %p138 = por %p136, %p137
    %p139 = scmp.ne.s32.totalorder %s128, %s131
    %p140 = scmp.eq.s32.totalorder %s15, 3
    %p141 = por %p139, %p140
    %p142 = scmp.ne.s32.totalorder %s131, %s132
    %p143 = scmp.eq.s32.totalorder %s15, 0
    %p144 = por %p142, %p143
    %p145 = scmp.ne.s32.totalorder %s131, %s132
    %p146 = scmp.eq.s32.totalorder %s16, 3
    %p147 = por %p145, %p146
    %p149 = scmp.ne.s32.totalorder %s132, %s148
    %p150 = scmp.eq.s32.totalorder %s16, 0
    %p151 = por %p149, %p150
    %p152 = scmp.le.s32.totalorder 1, %s10
    %p153 = scmp.lt.s32.totalorder %s10, 5
    %p154 = pnand %p152, %p153
    %p155 = pneg %p154
    // Predicated region
    $region9: #{embed_layer_forward.1} parent=5 // pred_check
      _
    $region10: #{embed_layer_forward.1} parent=5 // pred_check_branch
      %157 = sbr.rel (%p154) target = $region12
    $region11: #{embed_layer_forward.1} parent=5 // pred_region
      %s158 = ssub.s32 %s10, 1
      // Predicated region
      $region13: #{embed_layer_forward.1} parent=11 // pred_check
        %p159 = pneg %p71
      $region14: #{embed_layer_forward.1} parent=11 // pred_check_branch
        %161 = sbr.rel (%p159) target = $region16
      $region15: #{embed_layer_forward.1} parent=11 // pred_region
        _
      $region16: #{embed_layer_forward.1} parent=11 // pred_fallthru
        _
      // Predicated region
      $region17: #{embed_layer_forward.1} parent=11 // pred_check
        %p162 = pneg %p118
      $region18: #{embed_layer_forward.1} parent=11 // pred_check_branch
        %164 = sbr.rel (%p162) target = $region20
      $region19: #{embed_layer_forward.1} parent=11 // pred_region
        _
      $region20: #{embed_layer_forward.1} parent=11 // pred_fallthru
        _
    $region12: #{embed_layer_forward.1} parent=5 // pred_fallthru
      _
    %p165 = scmp.lt.s32.totalorder %s10, 4
    // Predicated region
    $region21: #{embed_layer_forward.1} parent=5 // pred_check
      %p166 = pneg %p165
    $region22: #{embed_layer_forward.1} parent=5 // pred_check_branch
      %168 = sbr.rel (%p166) target = $region24
    $region23: #{embed_layer_forward.1} parent=5 // pred_region
      // Predicated region
      $region25: #{embed_layer_forward.1} parent=23 // pred_check
        %p169 = pneg %p44
      $region26: #{embed_layer_forward.1} parent=23 // pred_check_branch
        %171 = sbr.rel (%p169) target = $region28
      $region27: #{embed_layer_forward.1} parent=23 // pred_region
        %p172 = scmp.lt.s32.totalorder %s17, 1
        %s173 = scalar_select %p172, %s17, 1
        %p174 = scmp.lt.s32.totalorder %s18, 1
        %s175 = scalar_select %p174, %s18, 1
        %s176 = smul.addr %s175, 2
        %s177 = smul.addr %s173, 4
        %s178 = sadd.s32 %s176, %s177
        %s179 = smul.addr %s178, 4
        %s180 = scalar_lea.vmem %s0, %s179
      $region28: #{embed_layer_forward.1} parent=23 // pred_fallthru
        _
      // Predicated region
      $region29: #{embed_layer_forward.1} parent=23 // pred_check
        %p181 = pneg %p91
      $region30: #{embed_layer_forward.1} parent=23 // pred_check_branch
        %183 = sbr.rel (%p181) target = $region32
      $region31: #{embed_layer_forward.1} parent=23 // pred_region
        %p184 = scmp.lt.s32.totalorder %s18, 1
        %s185 = scalar_select %p184, %s18, 1
        %s186 = smul.addr %s185, 8
        %s187 = scalar_lea.vmem %s2, %s186
      $region32: #{embed_layer_forward.1} parent=23 // pred_fallthru
        _
    $region24: #{embed_layer_forward.1} parent=5 // pred_fallthru
      _
    %p188 = scmp.le.s32.totalorder 1, %s10
    %p189 = scmp.lt.s32.totalorder %s10, 5
    %p190 = pnand %p188, %p189
    %p191 = pneg %p190
    // Predicated region
    $region33: #{embed_layer_forward.1} parent=5 // pred_check
      _
    $region34: #{embed_layer_forward.1} parent=5 // pred_check_branch
      %193 = sbr.rel (%p190) target = $region36
    $region35: #{embed_layer_forward.1} parent=5 // pred_region
      %s194 = ssub.s32 %s10, 1
      %p195 = scmp.lt.s32.totalorder %s19, 1
      %s196 = scalar_select %p195, %s19, 1
      %p197 = scmp.lt.s32.totalorder %s20, 1
      %s198 = scalar_select %p197, %s20, 1
      %s199 = smul.addr %s198, 2
      %s200 = smul.addr %s196, 4
      %s201 = sadd.s32 %s199, %s200
      %s202 = smul.addr %s201, 4
      %s203 = scalar_lea.vmem %s0, %s202
      %p204 = pneg %p50
      %p205 = pneg %p47
      %p206 = pneg %p71
      %p207 = pneg %p68
      %p208 = scmp.lt.s32.totalorder %s20, 1
      %s209 = scalar_select %p208, %s20, 1
      %s210 = smul.addr %s209, 8
      %s211 = scalar_lea.vmem %s2, %s210
      %p212 = pneg %p97
      %p213 = pneg %p94
      %p214 = pneg %p118
      %p215 = pneg %p115
      %p216 = pneg %p144
      %p217 = pneg %p141
      %p218 = scmp.lt.s32.totalorder %s19, 1
      %s219 = scalar_select %p218, %s19, 1
      %s220 = smul.addr %s219, 3
      %s221 = smul.addr %s220, 8
      %s222 = scalar_lea.vmem %s4, %s221
      %p223 = scmp.lt.s32.totalorder %s19, 1
      %s224 = scalar_select %p223, %s19, 1
      %p225 = scmp.lt.s32.totalorder %s20, 1
      %s226 = scalar_select %p225, %s20, 1
      %s227 = smul.addr %s226, 2
      %s228 = smul.addr %s224, 4
      %s229 = sadd.s32 %s227, %s228
      %s230 = smul.addr %s229, 4
      %s231 = scalar_lea.vmem %s0, %s230
      %p232 = scmp.lt.s32.totalorder %s20, 1
      %s233 = scalar_select %p232, %s20, 1
      %s234 = smul.addr %s233, 8
      %s235 = scalar_lea.vmem %s2, %s234
      %p236 = scmp.lt.s32.totalorder %s19, 1
      %s237 = scalar_select %p236, %s19, 1
      %s238 = smul.addr %s237, 3
      %s239 = smul.addr %s238, 8
      %s240 = scalar_lea.vmem %s4, %s239
      %p242 = scmp.eq.s32.totalorder %s20, 0
      // Predicated region
      $region37: #{embed_layer_forward.1} parent=35 // pred_check
        %p243 = pneg %p242
      $region38: #{embed_layer_forward.1} parent=35 // pred_check_branch
        %245 = sbr.rel (%p243) target = $region40
      $region39: #{embed_layer_forward.1} parent=35 // pred_region
        %v246 = vld [vmem:[%s3] sm:$0x1]
        %247 = vst [vmem:[%s240] sm:$0x1] %v246
      $region40: #{embed_layer_forward.1} parent=35 // pred_fallthru
        _
      %v248 = vld [vmem:[%s231] sm:$0xff]
      %v249 = vld [vmem:[%s1] sm:$0xf]
      %v250 = vld [vmem:[%s1 + $0x4] sm:$0xf]
      %v251 = vld [vmem:[%s1 + $0x8] sm:$0xf]
      %v252 = vld [vmem:[%s1 + $0xc] sm:$0xf]
      %v253 = vld [vmem:[%s1 + $0x10] sm:$0xf]
      %v254 = vld [vmem:[%s1 + $0x14] sm:$0xf]
      %v255 = vld [vmem:[%s1 + $0x18] sm:$0xf]
      %v256 = vld [vmem:[%s1 + $0x1c] sm:$0xf]
      %v257 = vld [vmem:[%s1 + $0x20] sm:$0xf]
      %v258 = vld [vmem:[%s1 + $0x24] sm:$0xf]
      %v259 = vld [vmem:[%s1 + $0x28] sm:$0xf]
      %v260 = vld [vmem:[%s1 + $0x2c] sm:$0xf]
      %v261 = vld [vmem:[%s1 + $0x30] sm:$0xf]
      %v262 = vld [vmem:[%s1 + $0x34] sm:$0xf]
      %v263 = vld [vmem:[%s1 + $0x38] sm:$0xf]
      %v264 = vld [vmem:[%s1 + $0x3c] sm:$0xf]
      %v265 = vld [vmem:[%s1 + $0x40] sm:$0xf]
      %v266 = vld [vmem:[%s1 + $0x44] sm:$0xf]
      %v267 = vld [vmem:[%s1 + $0x48] sm:$0xf]
      %v268 = vld [vmem:[%s1 + $0x4c] sm:$0xf]
      %v269 = vld [vmem:[%s1 + $0x50] sm:$0xf]
      %v270 = vld [vmem:[%s1 + $0x54] sm:$0xf]
      %v271 = vld [vmem:[%s1 + $0x58] sm:$0xf]
      %v272 = vld [vmem:[%s1 + $0x5c] sm:$0xf]
      %v273 = vld [vmem:[%s1 + $0x60] sm:$0xf]
      %v274 = vld [vmem:[%s1 + $0x64] sm:$0xf]
      %v275 = vld [vmem:[%s1 + $0x68] sm:$0xf]
      %v276 = vld [vmem:[%s1 + $0x6c] sm:$0xf]
      %v277 = vld [vmem:[%s1 + $0x70] sm:$0xf]
      %v278 = vld [vmem:[%s1 + $0x74] sm:$0xf]
      %v279 = vld [vmem:[%s1 + $0x78] sm:$0xf]
      %v280 = vld [vmem:[%s1 + $0x7c] sm:$0xf]
      %v281 = vld [vmem:[%s235] sm:$0xff]
      %v283 = vunpack.c.l.b16 %v248
      %v284 = vunpack.c.h.b16 %v248
      %v285 = vpack.c.b16 %v283, %v283
      %v286 = vpack.c.b16 %v284, %v284
      %v321 = vunpack.c.l.b16 %v249
      %v322 = vunpack.c.l.b16 %v250
      %v323 = vunpack.c.l.b16 %v251
      %v324 = vunpack.c.l.b16 %v252
      %v325 = vunpack.c.l.b16 %v253
      %v326 = vunpack.c.l.b16 %v254
      %v327 = vunpack.c.l.b16 %v255
      %v328 = vunpack.c.l.b16 %v256
      %v329 = vunpack.c.l.b16 %v257
      %v330 = vunpack.c.l.b16 %v258
      %v331 = vunpack.c.l.b16 %v259
      %v332 = vunpack.c.l.b16 %v260
      %v333 = vunpack.c.l.b16 %v261
      %v334 = vunpack.c.l.b16 %v262
      %v335 = vunpack.c.l.b16 %v263
      %v336 = vunpack.c.l.b16 %v264
      %v337 = vunpack.c.l.b16 %v265
      %v338 = vunpack.c.l.b16 %v266
      %v339 = vunpack.c.l.b16 %v267
      %v340 = vunpack.c.l.b16 %v268
      %v341 = vunpack.c.l.b16 %v269
      %v342 = vunpack.c.l.b16 %v270
      %v343 = vunpack.c.l.b16 %v271
      %v344 = vunpack.c.l.b16 %v272
      %v345 = vunpack.c.l.b16 %v273
      %v346 = vunpack.c.l.b16 %v274
      %v347 = vunpack.c.l.b16 %v275
      %v348 = vunpack.c.l.b16 %v276
      %v349 = vunpack.c.l.b16 %v277
      %v350 = vunpack.c.l.b16 %v278
      %v351 = vunpack.c.l.b16 %v279
      %v352 = vunpack.c.l.b16 %v280
      %v353 = vpack.c.b16 %v322, %v321
      %v354 = vpack.c.b16 %v324, %v323
      %v355 = vpack.c.b16 %v326, %v325
      %v356 = vpack.c.b16 %v328, %v327
      %v357 = vpack.c.b16 %v330, %v329
      %v358 = vpack.c.b16 %v332, %v331
      %v359 = vpack.c.b16 %v334, %v333
      %v360 = vpack.c.b16 %v336, %v335
      %v361 = vpack.c.b16 %v338, %v337
      %v362 = vpack.c.b16 %v340, %v339
      %v363 = vpack.c.b16 %v342, %v341
      %v364 = vpack.c.b16 %v344, %v343
      %v365 = vpack.c.b16 %v346, %v345
      %v366 = vpack.c.b16 %v348, %v347
      %v367 = vpack.c.b16 %v350, %v349
      %v368 = vpack.c.b16 %v352, %v351
      %385 = vmatprep.subr.bf16.mxu0 0
      %386 = vmatpush1.bf16.msra.mxu0 %v353
      %387 = vmatprep.subr.bf16.mxu0 0
      %388 = vmatpush1.bf16.msra.mxu0 %v354
      %389 = vmatprep.subr.bf16.mxu0 0
      %390 = vmatpush1.bf16.msra.mxu0 %v355
      %391 = vmatprep.subr.bf16.mxu0 0
      %392 = vmatpush1.bf16.msra.mxu0 %v356
      %393 = vmatprep.subr.bf16.mxu0 0
      %394 = vmatpush1.bf16.msra.mxu0 %v357
      %395 = vmatprep.subr.bf16.mxu0 0
      %396 = vmatpush1.bf16.msra.mxu0 %v358
      %397 = vmatprep.subr.bf16.mxu0 0
      %398 = vmatpush1.bf16.msra.mxu0 %v359
      %399 = vmatprep.subr.bf16.mxu0 0
      %400 = vmatpush1.bf16.msra.mxu0 %v360
      %401 = vmatprep.subr.bf16.mxu0 0
      %402 = vmatpush1.bf16.msra.mxu0 %v361
      %403 = vmatprep.subr.bf16.mxu0 0
      %404 = vmatpush1.bf16.msra.mxu0 %v362
      %405 = vmatprep.subr.bf16.mxu0 0
      %406 = vmatpush1.bf16.msra.mxu0 %v363
      %407 = vmatprep.subr.bf16.mxu0 0
      %408 = vmatpush1.bf16.msra.mxu0 %v364
      %409 = vmatprep.subr.bf16.mxu0 0
      %410 = vmatpush1.bf16.msra.mxu0 %v365
      %411 = vmatprep.subr.bf16.mxu0 0
      %412 = vmatpush1.bf16.msra.mxu0 %v366
      %413 = vmatprep.subr.bf16.mxu0 0
      %414 = vmatpush1.bf16.msra.mxu0 %v367
      %415 = vmatprep.subr.bf16.mxu0 0
      %416 = vmatpush1.bf16.msra.mxu0 %v368
      %417 = vmatprep.mubr.bf16.mxu0 %v286
      %418 = vmatmul.mubr.bf16.gmra.mrb[0].mxu0 %v285
      %v419 = vpop.f32.mrb[0].mxu0
      %v420 = vadd.f32 %v281, %v419
      %v421 = vpop.f32.mrb[0].mxu0
      %v422 = vpop.f32.mrb[0].mxu0
      %v423 = vpop.f32.mrb[0].mxu0
      %424 = vdwg.mxu0
      %s425 = smul.u32 %s20, 8
      %s426 = sadd.s32 %s425, 1
      %s427 = scalar_lea.vmem %s240, %s426
      %428 = vst [vmem:[%s427] sm:$0xff] %v420
      %p429 = scmp.lt.s32.totalorder %s19, 1
      %s430 = scalar_select %p429, %s19, 1
      %s431 = smul.addr %s430, 3
      %s432 = smul.addr %s431, 8
      %s433 = scalar_lea.vmem %s4, %s432
      // Predicated region
      $region41: #{embed_layer_forward.1} parent=35 // pred_check
        %p434 = pneg %p141
      $region42: #{embed_layer_forward.1} parent=35 // pred_check_branch
        %436 = sbr.rel (%p434) target = $region44
      $region43: #{embed_layer_forward.1} parent=35 // pred_region
        _
      $region44: #{embed_layer_forward.1} parent=35 // pred_fallthru
        _
    $region36: #{embed_layer_forward.1} parent=5 // pred_fallthru
      _
    %p437 = scmp.le.s32.totalorder 2, %s10
    // Predicated region
    $region45: #{embed_layer_forward.1} parent=5 // pred_check
      %p438 = pneg %p437
    $region46: #{embed_layer_forward.1} parent=5 // pred_check_branch
      %440 = sbr.rel (%p438) target = $region48
    $region47: #{embed_layer_forward.1} parent=5 // pred_region
      %s441 = ssub.s32 %s10, 2
      // Predicated region
      $region49: #{embed_layer_forward.1} parent=47 // pred_check
        %p442 = pneg %p147
      $region50: #{embed_layer_forward.1} parent=47 // pred_check_branch
        %444 = sbr.rel (%p442) target = $region52
      $region51: #{embed_layer_forward.1} parent=47 // pred_region
        %p445 = scmp.lt.s32.totalorder %s21, 1
        %s446 = scalar_select %p445, %s21, 1
        %s447 = smul.addr %s446, 3
        %s448 = smul.addr %s447, 8
        %s449 = scalar_lea.vmem %s4, %s448
      $region52: #{embed_layer_forward.1} parent=47 // pred_fallthru
        _
    $region48: #{embed_layer_forward.1} parent=5 // pred_fallthru
      _
  $region6: #{embed_layer_forward.1} parent=0 // loop_footer
    %s14 = sadd.s32 1, %s10
  $region7: #{embed_layer_forward.1} parent=0 // loop_footer_branch
    %9 = sbr.rel target = $region3
  $region8: #{embed_layer_forward.1} parent=0 // loop_exit
    _

</llo_original>
